<compile_context>
chip_gen: v6e
topology: v6e:2x2x1
jax: 0.10.0
libtpu: 0.0.40
codegen_flags: <defaults>
</compile_context>

<pallas_src>
import jax
import jax.numpy as jnp
from jax.experimental import pallas as pl
from jax.experimental.pallas import tpu as pltpu

HIDDEN = 32          # hidden_units
OUTPUT_SIZE = 16     # output_size (vocab)
SEQ = 8              # encoder sequence length
LANES = 4 * HIDDEN   # 128-lane-dense slab width

# ---- single weight-slab row layout (128 lanes wide, f32) ----
ROW_GATES_W = 0                           # 64 rows: [Wih_packed; Whh_packed] (2H, 4H)
ROW_GATES_B = ROW_GATES_W + 2 * HIDDEN    # 64: fused gate bias (1, 4H)
ROW_ATT_W   = 72                          # 64 rows: [W1; W2] (2H, H) in lanes 0:H
ROW_ATT_B   = ROW_ATT_W + 2 * HIDDEN      # 136: b1 + b2      (1, H)
ROW_VW      = ROW_ATT_B + 1               # 137: V weight row (1, H)
ROW_VB      = ROW_VW + 1                  # 138: V bias       (1, 1)
ROW_WOUT    = 144                         # 32 rows: Wout (H, V) in lanes 0:V
ROW_BOUT    = ROW_WOUT + HIDDEN           # 176: bout     (1, V)
ROW_EMB     = 184                         # 16 rows: embedding (V, H) in lanes 0:H
TOTAL_ROWS  = 200                         # sublane-aligned (multiple of 8)

# ---- activation slab (initial state), 32 lanes wide ----
ACT_ROWS = 16                             # rows 0:8 enc, row 8 h0, row 9 c0, rest zero

# ---- per-step packed output slab rows ----
OUT_ROW_LOGP = 0
OUT_ROW_ATTN = 1
OUT_ROW_H = 2
OUT_ROW_C = 3


def decoder_kernel(tok_ref, w_ref, act_ref, out_ref, hc_ref):
    H, V, S = HIDDEN, OUTPUT_SIZE, SEQ
    t = pl.program_id(0)

    # Initialize the carried (h, c) state from the activation slab on step 0.
    @pl.when(t == 0)
    def _():
        hc_ref[...] = act_ref[S:S + 2, :]

    # Token id for this step (clamped: VMEM refs have no runtime OOB check;
    # PyTorch's nn.Embedding would raise on an out-of-range id instead).
    idx = tok_ref[t]
    idx = jnp.maximum(jnp.minimum(idx, V - 1), 0)

    enc = act_ref[0:S, :]                                              # (S, H)
    h0 = hc_ref[0:1, :]                                                # (1, H)
    c0 = hc_ref[1:2, :]                                                # (1, H)

    # Embedding lookup; Dropout applied as eval-mode identity.
    # TODO(synk): training-mode Dropout (random mask) not implemented; eval semantics used.
    emb_row = w_ref[pl.ds(ROW_EMB + idx, 1), :]                        # (1, 128)
    x = emb_row[:, 0:H]                                                # (1, H)

    # ---- additive attention, q/k fused into ONE MXU matmul ----
    # [x | enc_s] @ [W1; W2] + (b1+b2)  ==  x@W1 + b1 + enc_s@W2 + b2
    lhs_att = jnp.concatenate([jnp.broadcast_to(x, (S, H)), enc], axis=1)      # (S, 2H)
    w_att = w_ref[ROW_ATT_W:ROW_ATT_W + 2 * H, 0:H]                    # (2H, H)
    b_att = w_ref[ROW_ATT_B:ROW_ATT_B + 1, 0:H]                        # (1, H)
    th = jnp.tanh(jnp.dot(lhs_att, w_att, preferred_element_type=jnp.float32) + b_att)

    # V projection via VPU multiply + lane reduce (avoids an N=1 MXU matmul).
    vw = w_ref[ROW_VW:ROW_VW + 1, 0:H]                                 # (1, H)
    vb = w_ref[ROW_VB:ROW_VB + 1, 0:1]                                 # (1, 1)
    score = jnp.sum(th * vw, axis=-1, keepdims=True) + vb              # (S, 1)

    # Transpose (S,1) -> (1,S) once (eye trick); softmax + context matmul are
    # then done in the lane-dense orientation.
    ii = jax.lax.broadcasted_iota(jnp.int32, (S, S), 0)
    jj = jax.lax.broadcasted_iota(jnp.int32, (S, S), 1)
    eye = (ii == jj).astype(jnp.float32)
    score_row = jnp.sum(score * eye, axis=0, keepdims=True)            # (1, S)

    m = jnp.max(score_row, axis=-1, keepdims=True)
    p = jnp.exp(score_row - m)
    attn_row = p / jnp.sum(p, axis=-1, keepdims=True)                  # (1, S), exact divide

    # context vector = attn @ enc  (MXU)
    ctx = jnp.dot(attn_row, enc, preferred_element_type=jnp.float32)   # (1, H)

    # ---- single-step LSTM cell: both gate matmuls fused into ONE ----
    lhs_g = jnp.concatenate([ctx, h0], axis=1)                         # (1, 2H)
    gates = (jnp.dot(lhs_g, w_ref[ROW_GATES_W:ROW_GATES_W + 2 * H, :],
                     preferred_element_type=jnp.float32)
             + w_ref[ROW_GATES_B:ROW_GATES_B + 1, :])                  # (1, 4H)
    i_g = jax.nn.sigmoid(gates[:, 0:H])
    f_g = jax.nn.sigmoid(gates[:, H:2 * H])
    g_g = jnp.tanh(gates[:, 2 * H:3 * H])
    o_g = jax.nn.sigmoid(gates[:, 3 * H:4 * H])
    c_n = f_g * c0 + i_g * g_g
    h_n = o_g * jnp.tanh(c_n)

    # carry (h, c) to the next decode step
    hc_ref[0:1, :] = h_n
    hc_ref[1:2, :] = c_n

    # ---- output projection + log_softmax(dim=1) ----
    wout = w_ref[ROW_WOUT:ROW_WOUT + H, 0:V]                           # (H, V)
    bout = w_ref[ROW_BOUT:ROW_BOUT + 1, 0:V]                           # (1, V)
    logits = jnp.dot(h_n, wout, preferred_element_type=jnp.float32) + bout
    z = logits - jnp.max(logits, axis=-1, keepdims=True)
    logp = z - jnp.log(jnp.sum(jnp.exp(z), axis=-1, keepdims=True))    # (1, V)

    # ---- assemble the (8,128) result slab in registers: ONE unmasked store ----
    def pad128(v):
        return jnp.concatenate(
            [v, jnp.zeros((1, LANES - v.shape[1]), jnp.float32)], axis=1)

    out_ref[...] = jnp.concatenate(
        [pad128(logp), pad128(attn_row), pad128(h_n), pad128(c_n),
         jnp.zeros((4, LANES), jnp.float32)], axis=0)                  # (8, 128)


def pack_params(params):
    """Host-side, one-time packing of all weights into a single (200,128) slab."""
    H, V = HIDDEN, OUTPUT_SIZE
    wih_p = jnp.concatenate([params["wih"][g] for g in range(4)], axis=1)     # (H, 4H)
    whh_p = jnp.concatenate([params["whh"][g] for g in range(4)], axis=1)     # (H, 4H)
    b_g = jnp.concatenate([params["b_lstm"][g] for g in range(4)], axis=1)    # (1, 4H)

    slab = jnp.zeros((TOTAL_ROWS, LANES), jnp.float32)
    slab = slab.at[ROW_GATES_W:ROW_GATES_W + H, :].set(wih_p)
    slab = slab.at[ROW_GATES_W + H:ROW_GATES_W + 2 * H, :].set(whh_p)
    slab = slab.at[ROW_GATES_B, :].set(b_g[0])

    slab = slab.at[ROW_ATT_W:ROW_ATT_W + H, 0:H].set(params["w1"])
    slab = slab.at[ROW_ATT_W + H:ROW_ATT_W + 2 * H, 0:H].set(params["w2"])
    slab = slab.at[ROW_ATT_B, 0:H].set(params["b1"][0] + params["b2"][0])
    slab = slab.at[ROW_VW, 0:H].set(params["vw"][:, 0])
    slab = slab.at[ROW_VB, 0].set(params["vb"][0, 0])

    slab = slab.at[ROW_WOUT:ROW_WOUT + H, 0:V].set(params["wout"])
    slab = slab.at[ROW_BOUT, 0:V].set(params["bout"][0])

    slab = slab.at[ROW_EMB:ROW_EMB + V, 0:H].set(params["emb"])
    return slab


def decoder_decode(token_ids, weights, h0, c0, enc):
    """Run T steps of Decoder.forward in ONE pallas_call, carrying (h, c)."""
    T = token_ids.shape[0]
    H, V, S = HIDDEN, OUTPUT_SIZE, SEQ

    # single merged activation input: enc + initial h0/c0
    act = jnp.zeros((ACT_ROWS, H), jnp.float32)
    act = act.at[0:S, :].set(enc)
    act = act.at[S, :].set(h0[0])
    act = act.at[S + 1, :].set(c0[0])

    grid_spec = pltpu.PrefetchScalarGridSpec(
        num_scalar_prefetch=1,                 # token ids -> SMEM
        grid=(T,),
        in_specs=[
            # constant index maps -> DMA'd once, VMEM-resident across all steps
            pl.BlockSpec((TOTAL_ROWS, LANES), lambda t, tok: (0, 0)),
            pl.BlockSpec((ACT_ROWS, H), lambda t, tok: (0, 0)),
        ],
        out_specs=pl.BlockSpec((8, LANES), lambda t, tok: (t, 0)),
        scratch_shapes=[pltpu.VMEM((2, H), jnp.float32)],   # carried (h, c)
    )
    out = pl.pallas_call(
        decoder_kernel,
        out_shape=jax.ShapeDtypeStruct((T * 8, LANES), jnp.float32),
        grid_spec=grid_spec,
        compiler_params=pltpu.CompilerParams(
            dimension_semantics=("arbitrary",)),    # steps are sequential (h/c carry)
    )(token_ids, weights, act)

    out = out.reshape(T, 8, LANES)
    logp = out[:, OUT_ROW_LOGP, 0:V][:, None, :]      # (T, 1, V)
    attn = out[:, OUT_ROW_ATTN, 0:S][:, :, None]      # (T, S, 1)  PyTorch layout
    h_all = out[:, OUT_ROW_H, 0:H][:, None, :]        # (T, 1, H)
    c_all = out[:, OUT_ROW_C, 0:H][:, None, :]        # (T, 1, H)
    return logp, (h_all, c_all), attn


def reference_forward(token_idx, params, h0, c0, enc):
    """Pure-JAX mirror of the PyTorch Decoder.forward (eval mode), single step."""
    x = params["emb"][token_idx[0]][None, :]
    q = x @ params["w1"] + params["b1"]
    k = enc @ params["w2"] + params["b2"]
    score = jnp.tanh(q + k) @ params["vw"] + params["vb"]
    attn = jax.nn.softmax(score, axis=0)
    ctx = jnp.sum(attn * enc, axis=0, keepdims=True)

    def gate(g):
        return ctx @ params["wih"][g] + h0 @ params["whh"][g] + params["b_lstm"][g]

    i = jax.nn.sigmoid(gate(0))
    f = jax.nn.sigmoid(gate(1))
    g_ = jnp.tanh(gate(2))
    o = jax.nn.sigmoid(gate(3))
    c = f * c0 + i * g_
    h = o * jnp.tanh(c)
    logits = h @ params["wout"] + params["bout"]
    logp = jax.nn.log_softmax(logits, axis=1)
    return logp, (h, c), attn


def init_params(key):
    H, V = HIDDEN, OUTPUT_SIZE
    ks = jax.random.split(key, 12)
    s = 0.1
    return {
        "emb":    jax.random.normal(ks[0], (V, H), jnp.float32) * s,
        "w1":     jax.random.normal(ks[1], (H, H), jnp.float32) * s,
        "b1":     jax.random.normal(ks[2], (1, H), jnp.float32) * s,
        "w2":     jax.random.normal(ks[3], (H, H), jnp.float32) * s,
        "b2":     jax.random.normal(ks[4], (1, H), jnp.float32) * s,
        "vw":     jax.random.normal(ks[5], (H, 1), jnp.float32) * s,
        "vb":     jax.random.normal(ks[6], (1, 1), jnp.float32) * s,
        "wih":    jax.random.normal(ks[7], (4, H, H), jnp.float32) * s,   # gate order i,f,g,o
        "whh":    jax.random.normal(ks[8], (4, H, H), jnp.float32) * s,
        "b_lstm": jax.random.normal(ks[9], (4, 1, H), jnp.float32) * s,   # bias_ih + bias_hh combined
        "wout":   jax.random.normal(ks[10], (H, V), jnp.float32) * s,
        "bout":   jax.random.normal(ks[11], (1, V), jnp.float32) * s,
    }


if __name__ == "__main__":
    k_params, k_data = jax.random.split(jax.random.PRNGKey(0))
    params = init_params(k_params)
    weights = pack_params(params)   # packed once on the host, VMEM-resident for the whole decode

    k_enc, k_h, k_c = jax.random.split(k_data, 3)
    enc = jax.random.normal(k_enc, (SEQ, HIDDEN), jnp.float32)   # encoder_output_sequence (S,1,H) w/ batch squeezed
    h0 = jax.random.normal(k_h, (1, HIDDEN), jnp.float32)        # hidden_states[0] squeezed
    c0 = jax.random.normal(k_c, (1, HIDDEN), jnp.float32)        # hidden_states[1] squeezed
    token_ids = jnp.array([3, 7, 0, 15], dtype=jnp.int32)        # T=4 decode steps

    logp_k, (h_k, c_k), attn_k = decoder_decode(token_ids, weights, h0, c0, enc)
    jax.block_until_ready((logp_k, h_k, c_k, attn_k))

    # step-by-step sanity check against a pure-JAX reference of the PyTorch forward
    h, c = h0, c0
    for t in range(token_ids.shape[0]):
        lp, (h, c), at = reference_forward(token_ids[t:t + 1], params, h, c, enc)
        for a, b in ((logp_k[t], lp), (attn_k[t], at), (h_k[t], h), (c_k[t], c)):
            assert a.shape == b.shape, "shape mismatch vs reference"
            assert jnp.max(jnp.abs(a - b)) < 5e-3, "mismatch vs reference"

    print("KERNEL_OK")
</pallas_src>

<mosaic_0001>
module attributes {stable_mosaic.version = 11 : i64} {
  func.func @decoder_kernel(%arg0: i32, %arg1: memref<4xi32, #tpu.memory_space<smem>>, %arg2: memref<200x128xf32, #tpu.memory_space<vmem>>, %arg3: memref<16x32xf32, #tpu.memory_space<vmem>>, %arg4: memref<8x128xf32, #tpu.memory_space<vmem>>, %arg5: memref<2x32xf32, #tpu.memory_space<vmem>>) attributes {dimension_semantics = [#tpu.dimension_semantics<arbitrary>], iteration_bounds = array<i64: 4>, scalar_prefetch = 1 : i64, scratch_operands = 1 : i64, tpu.core_type = #tpu.core_type<tc>, window_params = [{pipeline_mode = #tpu.pipeline_mode<synchronous>, transform_indices = @transform_0, window_bounds = array<i64: 200, 128>}, {pipeline_mode = #tpu.pipeline_mode<synchronous>, transform_indices = @transform_1, window_bounds = array<i64: 16, 32>}, {transform_indices = @transform_2, window_bounds = array<i64: 8, 128>}]} {
    %c0_i32 = arith.constant 0 : i32
    %0 = arith.cmpi eq, %arg0, %c0_i32 : i32
    %1 = arith.extui %0 : i1 to i32
    %c0_i32_0 = arith.constant 0 : i32
    %2 = arith.cmpi ne, %1, %c0_i32_0 : i32
    scf.if %2 {
      %c8 = arith.constant 8 : index
      %c0_39 = arith.constant 0 : index
      %107 = vector.load %arg3[%c8, %c0_39] : memref<16x32xf32, #tpu.memory_space<vmem>>, vector<2x32xf32>
      %c0_40 = arith.constant 0 : index
      %c0_41 = arith.constant 0 : index
      %108 = vector.load %arg5[%c0_40, %c0_41] : memref<2x32xf32, #tpu.memory_space<vmem>>, vector<2x32xf32>
      tpu.vector_store %arg5[%c0_40, %c0_41], %107 {strides = array<i32>} : memref<2x32xf32, #tpu.memory_space<vmem>>, vector<2x32xf32>,
    } else {
    }
    %3 = arith.index_cast %arg0 : i32 to index
    %4 = memref.load %arg1[%3] : memref<4xi32, #tpu.memory_space<smem>>
    %c15_i32 = arith.constant 15 : i32
    %5 = arith.minsi %4, %c15_i32 : i32
    %c0_i32_1 = arith.constant 0 : i32
    %6 = arith.maxsi %5, %c0_i32_1 : i32
    %c0 = arith.constant 0 : index
    %c0_2 = arith.constant 0 : index
    %7 = vector.load %arg3[%c0, %c0_2] : memref<16x32xf32, #tpu.memory_space<vmem>>, vector<8x32xf32>
    %c0_3 = arith.constant 0 : index
    %c0_4 = arith.constant 0 : index
    %8 = vector.load %arg5[%c0_3, %c0_4] : memref<2x32xf32, #tpu.memory_space<vmem>>, vector<1x32xf32>
    %c1 = arith.constant 1 : index
    %c0_5 = arith.constant 0 : index
    %9 = vector.load %arg5[%c1, %c0_5] : memref<2x32xf32, #tpu.memory_space<vmem>>, vector<1x32xf32>
    %c184_i32 = arith.constant 184 : i32
    %10 = arith.addi %c184_i32, %6 : i32
    %11 = arith.index_cast %10 : i32 to index
    %c0_6 = arith.constant 0 : index
    %12 = vector.load %arg2[%11, %c0_6] : memref<200x128xf32, #tpu.memory_space<vmem>>, vector<1x128xf32>
    %13 = vector.extract_strided_slice %12 {offsets = [0, 0], sizes = [1, 32], strides = [1, 1]} : vector<1x128xf32> to vector<1x32xf32>
    %14 = vector.shape_cast %13 : vector<1x32xf32> to vector<1x32xf32>
    %15 = vector.broadcast %14 : vector<1x32xf32> to vector<8x32xf32>
    %16 = tpu.concatenate %15, %7 in 1 : vector<8x32xf32>, vector<8x32xf32> -> vector<8x64xf32>
    %c72 = arith.constant 72 : index
    %c0_7 = arith.constant 0 : index
    %17 = vector.load %arg2[%c72, %c0_7] : memref<200x128xf32, #tpu.memory_space<vmem>>, vector<64x32xf32>
    %c136 = arith.constant 136 : index
    %c0_8 = arith.constant 0 : index
    %18 = vector.load %arg2[%c136, %c0_8] : memref<200x128xf32, #tpu.memory_space<vmem>>, vector<1x32xf32>
    %cst = arith.constant dense<0.000000e+00> : vector<8x32xf32>
    %19 = tpu.matmul %16, %17, %cst {dimension_numbers = #tpu.dot_dimension_numbers<[1], [0], [0], [1], [0, 0, 1, 1], [], []>} : vector<8x64xf32>, vector<64x32xf32>, vector<8x32xf32> -> vector<8x32xf32>
    %20 = vector.broadcast %18 : vector<1x32xf32> to vector<8x32xf32>
    %21 = arith.addf %19, %20 : vector<8x32xf32>
    %22 = math.tanh %21 : vector<8x32xf32>
    %c137 = arith.constant 137 : index
    %c0_9 = arith.constant 0 : index
    %23 = vector.load %arg2[%c137, %c0_9] : memref<200x128xf32, #tpu.memory_space<vmem>>, vector<1x32xf32>
    %c138 = arith.constant 138 : index
    %c0_10 = arith.constant 0 : index
    %24 = vector.load %arg2[%c138, %c0_10] : memref<200x128xf32, #tpu.memory_space<vmem>>, vector<1x1xf32>
    %25 = vector.broadcast %23 : vector<1x32xf32> to vector<8x32xf32>
    %26 = arith.mulf %22, %25 : vector<8x32xf32>
    %cst_11 = arith.constant dense<0.000000e+00> : vector<8xf32>
    %27 = vector.multi_reduction <add>, %26, %cst_11 [1] : vector<8x32xf32> to vector<8xf32>
    %28 = vector.shape_cast %27 : vector<8xf32> to vector<8x1xf32>
    %29 = vector.broadcast %24 : vector<1x1xf32> to vector<8x1xf32>
    %30 = arith.addf %28, %29 : vector<8x1xf32>
    %31 = tpu.iota {dimensions = array<i32: 0>} : vector<8x8xi32>
    %32 = tpu.iota {dimensions = array<i32: 1>} : vector<8x8xi32>
    %33 = arith.cmpi eq, %31, %32 : vector<8x8xi32>
    %34 = arith.extui %33 : vector<8x8xi1> to vector<8x8xi32>
    %35 = arith.sitofp %34 : vector<8x8xi32> to vector<8x8xf32>
    %36 = vector.broadcast %30 : vector<8x1xf32> to vector<8x8xf32>
    %37 = arith.mulf %36, %35 : vector<8x8xf32>
    %cst_12 = arith.constant dense<0.000000e+00> : vector<8xf32>
    %38 = vector.multi_reduction <add>, %37, %cst_12 [0] : vector<8x8xf32> to vector<8xf32>
    %39 = vector.shape_cast %38 : vector<8xf32> to vector<1x8xf32>
    %cst_13 = arith.constant dense<0xFF800000> : vector<1xf32>
    %40 = vector.multi_reduction <maximumf>, %39, %cst_13 [1] : vector<1x8xf32> to vector<1xf32>
    %41 = vector.shape_cast %40 : vector<1xf32> to vector<1x1xf32>
    %42 = vector.broadcast %41 : vector<1x1xf32> to vector<1x8xf32>
    %43 = arith.subf %39, %42 : vector<1x8xf32>
    %44 = math.exp %43 : vector<1x8xf32>
    %cst_14 = arith.constant dense<0.000000e+00> : vector<1xf32>
    %45 = vector.multi_reduction <add>, %44, %cst_14 [1] : vector<1x8xf32> to vector<1xf32>
    %46 = vector.shape_cast %45 : vector<1xf32> to vector<1x1xf32>
    %47 = vector.broadcast %46 : vector<1x1xf32> to vector<1x8xf32>
    %48 = arith.divf %44, %47 : vector<1x8xf32>
    %cst_15 = arith.constant dense<0.000000e+00> : vector<1x32xf32>
    %49 = tpu.matmul %48, %7, %cst_15 {dimension_numbers = #tpu.dot_dimension_numbers<[1], [0], [0], [1], [0, 0, 1, 1], [], []>} : vector<1x8xf32>, vector<8x32xf32>, vector<1x32xf32> -> vector<1x32xf32>
    %50 = tpu.concatenate %49, %8 in 1 : vector<1x32xf32>, vector<1x32xf32> -> vector<1x64xf32>
    %c0_16 = arith.constant 0 : index
    %c0_17 = arith.constant 0 : index
    %51 = vector.load %arg2[%c0_16, %c0_17] : memref<200x128xf32, #tpu.memory_space<vmem>>, vector<64x128xf32>
    %cst_18 = arith.constant dense<0.000000e+00> : vector<1x128xf32>
    %52 = tpu.matmul %50, %51, %cst_18 {dimension_numbers = #tpu.dot_dimension_numbers<[1], [0], [0], [1], [0, 0, 1, 1], [], []>} : vector<1x64xf32>, vector<64x128xf32>, vector<1x128xf32> -> vector<1x128xf32>
    %c64 = arith.constant 64 : index
    %c0_19 = arith.constant 0 : index
    %53 = vector.load %arg2[%c64, %c0_19] : memref<200x128xf32, #tpu.memory_space<vmem>>, vector<1x128xf32>
    %54 = arith.addf %52, %53 : vector<1x128xf32>
    %55 = vector.extract_strided_slice %54 {offsets = [0, 0], sizes = [1, 32], strides = [1, 1]} : vector<1x128xf32> to vector<1x32xf32>
    %56 = arith.negf %55 : vector<1x32xf32>
    %57 = math.exp %56 : vector<1x32xf32>
    %cst_20 = arith.constant 1.000000e+00 : f32
    %58 = vector.broadcast %cst_20 : f32 to vector<1x32xf32>
    %59 = arith.addf %58, %57 : vector<1x32xf32>
    %60 = arith.divf %58, %59 : vector<1x32xf32>
    %61 = vector.extract_strided_slice %54 {offsets = [0, 32], sizes = [1, 32], strides = [1, 1]} : vector<1x128xf32> to vector<1x32xf32>
    %62 = arith.negf %61 : vector<1x32xf32>
    %63 = math.exp %62 : vector<1x32xf32>
    %cst_21 = arith.constant 1.000000e+00 : f32
    %64 = vector.broadcast %cst_21 : f32 to vector<1x32xf32>
    %65 = arith.addf %64, %63 : vector<1x32xf32>
    %66 = arith.divf %64, %65 : vector<1x32xf32>
    %67 = vector.extract_strided_slice %54 {offsets = [0, 64], sizes = [1, 32], strides = [1, 1]} : vector<1x128xf32> to vector<1x32xf32>
    %68 = math.tanh %67 : vector<1x32xf32>
    %69 = vector.extract_strided_slice %54 {offsets = [0, 96], sizes = [1, 32], strides = [1, 1]} : vector<1x128xf32> to vector<1x32xf32>
    %70 = arith.negf %69 : vector<1x32xf32>
    %71 = math.exp %70 : vector<1x32xf32>
    %cst_22 = arith.constant 1.000000e+00 : f32
    %72 = vector.broadcast %cst_22 : f32 to vector<1x32xf32>
    %73 = arith.addf %72, %71 : vector<1x32xf32>
    %74 = arith.divf %72, %73 : vector<1x32xf32>
    %75 = arith.mulf %66, %9 : vector<1x32xf32>
    %76 = arith.mulf %60, %68 : vector<1x32xf32>
    %77 = arith.addf %75, %76 : vector<1x32xf32>
    %78 = math.tanh %77 : vector<1x32xf32>
    %79 = arith.mulf %74, %78 : vector<1x32xf32>
    %c0_23 = arith.constant 0 : index
    %c0_24 = arith.constant 0 : index
    %80 = vector.load %arg5[%c0_23, %c0_24] : memref<2x32xf32, #tpu.memory_space<vmem>>, vector<1x32xf32>
    tpu.vector_store %arg5[%c0_23, %c0_24], %79 {strides = array<i32>} : memref<2x32xf32, #tpu.memory_space<vmem>>, vector<1x32xf32>,
    %c1_25 = arith.constant 1 : index
    %c0_26 = arith.constant 0 : index
    %81 = vector.load %arg5[%c1_25, %c0_26] : memref<2x32xf32, #tpu.memory_space<vmem>>, vector<1x32xf32>
    tpu.vector_store %arg5[%c1_25, %c0_26], %77 {strides = array<i32>} : memref<2x32xf32, #tpu.memory_space<vmem>>, vector<1x32xf32>,
    %c144 = arith.constant 144 : index
    %c0_27 = arith.constant 0 : index
    %82 = vector.load %arg2[%c144, %c0_27] : memref<200x128xf32, #tpu.memory_space<vmem>>, vector<32x16xf32>
    %c176 = arith.constant 176 : index
    %c0_28 = arith.constant 0 : index
    %83 = vector.load %arg2[%c176, %c0_28] : memref<200x128xf32, #tpu.memory_space<vmem>>, vector<1x16xf32>
    %cst_29 = arith.constant dense<0.000000e+00> : vector<1x16xf32>
    %84 = tpu.matmul %79, %82, %cst_29 {dimension_numbers = #tpu.dot_dimension_numbers<[1], [0], [0], [1], [0, 0, 1, 1], [], []>} : vector<1x32xf32>, vector<32x16xf32>, vector<1x16xf32> -> vector<1x16xf32>
    %85 = arith.addf %84, %83 : vector<1x16xf32>
    %cst_30 = arith.constant dense<0xFF800000> : vector<1xf32>
    %86 = vector.multi_reduction <maximumf>, %85, %cst_30 [1] : vector<1x16xf32> to vector<1xf32>
    %87 = vector.shape_cast %86 : vector<1xf32> to vector<1x1xf32>
    %88 = vector.broadcast %87 : vector<1x1xf32> to vector<1x16xf32>
    %89 = arith.subf %85, %88 : vector<1x16xf32>
    %90 = math.exp %89 : vector<1x16xf32>
    %cst_31 = arith.constant dense<0.000000e+00> : vector<1xf32>
    %91 = vector.multi_reduction <add>, %90, %cst_31 [1] : vector<1x16xf32> to vector<1xf32>
    %92 = vector.shape_cast %91 : vector<1xf32> to vector<1x1xf32>
    %93 = math.log %92 : vector<1x1xf32>
    %94 = vector.broadcast %93 : vector<1x1xf32> to vector<1x16xf32>
    %95 = arith.subf %89, %94 : vector<1x16xf32>
    %cst_32 = arith.constant 0.000000e+00 : f32
    %96 = vector.broadcast %cst_32 : f32 to vector<1x112xf32>
    %97 = tpu.concatenate %95, %96 in 1 : vector<1x16xf32>, vector<1x112xf32> -> vector<1x128xf32>
    %cst_33 = arith.constant 0.000000e+00 : f32
    %98 = vector.broadcast %cst_33 : f32 to vector<1x120xf32>
    %99 = tpu.concatenate %48, %98 in 1 : vector<1x8xf32>, vector<1x120xf32> -> vector<1x128xf32>
    %cst_34 = arith.constant 0.000000e+00 : f32
    %100 = vector.broadcast %cst_34 : f32 to vector<1x96xf32>
    %101 = tpu.concatenate %79, %100 in 1 : vector<1x32xf32>, vector<1x96xf32> -> vector<1x128xf32>
    %cst_35 = arith.constant 0.000000e+00 : f32
    %102 = vector.broadcast %cst_35 : f32 to vector<1x96xf32>
    %103 = tpu.concatenate %77, %102 in 1 : vector<1x32xf32>, vector<1x96xf32> -> vector<1x128xf32>
    %cst_36 = arith.constant 0.000000e+00 : f32
    %104 = vector.broadcast %cst_36 : f32 to vector<4x128xf32>
    %105 = tpu.concatenate %97, %99, %101, %103, %104 in 0 : vector<1x128xf32>, vector<1x128xf32>, vector<1x128xf32>, vector<1x128xf32>, vector<4x128xf32> -> vector<8x128xf32>
    %c0_37 = arith.constant 0 : index
    %c0_38 = arith.constant 0 : index
    %106 = vector.load %arg4[%c0_37, %c0_38] : memref<8x128xf32, #tpu.memory_space<vmem>>, vector<8x128xf32>
    tpu.vector_store %arg4[%c0_37, %c0_38], %105 {strides = array<i32>} : memref<8x128xf32, #tpu.memory_space<vmem>>, vector<8x128xf32>,
    return
  }
  func.func @transform_0(%arg0: i32, %arg1: memref<4xi32, #tpu.memory_space<smem>>) -> (i32, i32) {
    %c0_i32 = arith.constant 0 : i32
    %c0_i32_0 = arith.constant 0 : i32
    %c0_i32_1 = arith.constant 0 : i32
    return %c0_i32, %c0_i32_0 : i32, i32
  }
  func.func @transform_1(%arg0: i32, %arg1: memref<4xi32, #tpu.memory_space<smem>>) -> (i32, i32) {
    %c0_i32 = arith.constant 0 : i32
    %c0_i32_0 = arith.constant 0 : i32
    %c0_i32_1 = arith.constant 0 : i32
    return %c0_i32, %c0_i32_0 : i32, i32
  }
  func.func @transform_2(%arg0: i32, %arg1: memref<4xi32, #tpu.memory_space<smem>>) -> (i32, i32) {
    %c0_i32 = arith.constant 0 : i32
    %c0_i32_0 = arith.constant 0 : i32
    return %arg0, %c0_i32 : i32, i32
  }
}

</mosaic_0001>

<llo_original>
// kernel: tpu_custom_call.1
$region0: #{tpu_custom_call.1}
  #allocation0 [shape = 'u32[]', space=smem, size = 0x4, offset = 0x4, fixed_abs, tag = 'smem constant byte address 0x4 - core index']
  #allocation1 [shape = 'u32[144,128]{1,0:T(1,128)}', space=vmem, size = 0x12000, scoped, tag = 'internal scratch']
  #allocation2 [shape = 'f32[2,32]{1,0:T(2,128)}', space=vmem, size = 0x400, scoped, tag = 'scratch operand']
  #allocation3 [shape = 's32[1]{0}', space=sflag, size = 0x4, scoped, tag = 'scoped memory for tpu_custom_call.1']
  #allocation4 [shape = 'u8[512]{0}', space=smem, size = 0x200, scoped, tag = 'prefetched SMEM operand 0']
  %s0 = inlined_call_operand.hbm [shape: s32[4], index: 0, kind: input, shape index: {}]
  %s1 = inlined_call_operand.hbm [shape: f32[200,128], index: 1, kind: input, shape index: {}]
  %s2 = inlined_call_operand.hbm [shape: f32[16,32], index: 2, kind: input, shape index: {}]
  %s3 = inlined_call_operand.hbm [shape: f32[32,128], index: 3, kind: output, shape index: {}]
  %s4 = sld [smem:[#allocation0]]
  $region53: #{tpu_custom_call.1} parent=0
    _
  %s6 = ssub.s32 1, %s4
  %s7 = scalar_select 0, %s6, %s4
  %9 = dma.hbm_to_smem %s0, 16, [#allocation4], [#allocation3]
  %10 = dma.done [#allocation3], 16
  %11 = sfence
  $region1: #{tpu_custom_call.1} parent=0
    #allocation5 [shape = 'u8[102400]{0}', space=vmem, size = 0x19000, scoped, tag = 'input window, operand 1, single buffered']
    #allocation6 [shape = 's32[2]{0}', space=sflag, size = 0x8, scoped, tag = 'scoped memory for tpu_custom_call.1']
    #allocation7 [shape = 's32[2]{0}', space=sflag, size = 0x8, scoped, tag = 'scoped memory for tpu_custom_call.1']
    #allocation8 [shape = 'u8[8192]{0}', space=vmem, size = 0x2000, scoped, tag = 'input window, operand 2, single buffered']
    #allocation9 [shape = 's32[1]{0}', space=sflag, size = 0x4, scoped, tag = 'scoped memory for tpu_custom_call.1']
    #allocation10 [shape = 'u8[8192]{0}', space=vmem, size = 0x2000, scoped, tag = 'output window, operand 0']
    %12 = vsyncpa [#allocation6], 0
    %13 = vsyncpa [#allocation9], 0
    %14 = vsyncpa [#allocation7], 0
    %s15 = scalar_lea.sflag [#allocation7], 1
    %16 = vsyncpa %s15, 0
    loop: start=0, step=1, limit=6
    $region2: #{tpu_custom_call.1} parent=1 // loop_pre_header
      _
    $region3: #{tpu_custom_call.1} parent=1 // loop_header
      %s18 = sphi 0, %s22
      %p19 = scmp.ge.s32.totalorder %s18, 6
      %s26 = sphi 0, %s26
      %s28 = sphi 0, %s26
      %s29 = sphi 0, %s28
      %s43 = sphi 0, %s29
      %s47 = sphi 0, %s47
      %s49 = sphi 0, %s47
      %s50 = sphi 0, %s49
      %s64 = sphi 0, %s50
      %s70 = sphi 0, %s72
      %s73 = sphi 0, %s70
      %s74 = sphi 0, %s73
      %s90 = sphi 0, %s74
    $region4: #{tpu_custom_call.1} parent=1 // loop_header_branch
      %21 = sbr.rel (%p19) target = $region8
    $region5: #{tpu_custom_call.1} parent=1 // loop_body
      %s23 = ssub.s32 %s18, 1
      %s24 = ssub.s32 %s18, 2
      %s25 = sadd.s32 %s18, 1
      %s27 = sadd.s32 %s26, 1
      %p30 = scmp.eq.s32.totalorder %s18, 3
      %p31 = scmp.ne.s32.totalorder %s26, %s28
      %p32 = scmp.eq.s32.totalorder %s18, 0
      %p33 = por %p31, %p32
      %p34 = scmp.ne.s32.totalorder %s26, %s28
      %p35 = scmp.eq.s32.totalorder %s23, 3
      %p36 = por %p34, %p35
      %p37 = scmp.ne.s32.totalorder %s28, %s29
      %p38 = scmp.eq.s32.totalorder %s23, 0
      %p39 = por %p37, %p38
      %p40 = scmp.ne.s32.totalorder %s28, %s29
      %p41 = scmp.eq.s32.totalorder %s24, 3
      %p42 = por %p40, %p41
      %p44 = scmp.ne.s32.totalorder %s29, %s43
      %p45 = scmp.eq.s32.totalorder %s24, 0
      %p46 = por %p44, %p45
      %s48 = sadd.s32 %s47, 1
      %p51 = scmp.eq.s32.totalorder %s18, 3
      %p52 = scmp.ne.s32.totalorder %s47, %s49
      %p53 = scmp.eq.s32.totalorder %s18, 0
      %p54 = por %p52, %p53
      %p55 = scmp.ne.s32.totalorder %s47, %s49
      %p56 = scmp.eq.s32.totalorder %s23, 3
      %p57 = por %p55, %p56
      %p58 = scmp.ne.s32.totalorder %s49, %s50
      %p59 = scmp.eq.s32.totalorder %s23, 0
      %p60 = por %p58, %p59
      %p61 = scmp.ne.s32.totalorder %s49, %s50
      %p62 = scmp.eq.s32.totalorder %s24, 3
      %p63 = por %p61, %p62
      %p65 = scmp.ne.s32.totalorder %s50, %s64
      %p66 = scmp.eq.s32.totalorder %s24, 0
      %p67 = por %p65, %p66
      %s68 = ssub.s32 %s18, %s25
      %p69 = scmp.eq.s32.totalorder %s68, 0
      %s71 = sadd.s32 %s70, 1
      %s72 = scalar_select %p69, %s70, %s71
      %p75 = pneg %p69
      %p76 = scmp.eq.s32.totalorder %s18, 3
      %p77 = por %p75, %p76
      %p78 = scmp.ne.s32.totalorder %s70, %s73
      %p79 = scmp.eq.s32.totalorder %s18, 0
      %p80 = por %p78, %p79
      %p81 = scmp.ne.s32.totalorder %s70, %s73
      %p82 = scmp.eq.s32.totalorder %s23, 3
      %p83 = por %p81, %p82
      %p84 = scmp.ne.s32.totalorder %s73, %s74
      %p85 = scmp.eq.s32.totalorder %s23, 0
      %p86 = por %p84, %p85
      %p87 = scmp.ne.s32.totalorder %s73, %s74
      %p88 = scmp.eq.s32.totalorder %s24, 3
      %p89 = por %p87, %p88
      %p91 = scmp.ne.s32.totalorder %s74, %s90
      %p92 = scmp.eq.s32.totalorder %s24, 0
      %p93 = por %p91, %p92
      %p94 = scmp.le.s32.totalorder 1, %s18
      %p95 = scmp.lt.s32.totalorder %s18, 5
      %p96 = pnand %p94, %p95
      %p97 = pneg %p96
      // Predicated region
      $region9: #{tpu_custom_call.1} parent=5 // pred_check
        _
      $region10: #{tpu_custom_call.1} parent=5 // pred_check_branch
        %99 = sbr.rel (%p96) target = $region12
      $region11: #{tpu_custom_call.1} parent=5 // pred_region
        %s100 = ssub.s32 %s18, 1
        // Predicated region
        $region13: #{tpu_custom_call.1} parent=11 // pred_check
          %p101 = pneg %p39
        $region14: #{tpu_custom_call.1} parent=11 // pred_check_branch
          %103 = sbr.rel (%p101) target = $region16
        $region15: #{tpu_custom_call.1} parent=11 // pred_region
          %s105 = ssub.s32 3200, 3200
          %106 = vsyncadd [#allocation6], %s105
          %s107 = sshll.u32 [#allocation5], 4
          %s108 = int_to_ptr.vmem [resolvable:$true] %s107
          %113 = dma.hbm_to_vmem [thread:$0]  %s1, 3200, %s108, [#allocation6], 128, 128, 8
        $region16: #{tpu_custom_call.1} parent=11 // pred_fallthru
          _
        // Predicated region
        $region17: #{tpu_custom_call.1} parent=11 // pred_check
          %p114 = pneg %p60
        $region18: #{tpu_custom_call.1} parent=11 // pred_check_branch
          %116 = sbr.rel (%p114) target = $region20
        $region19: #{tpu_custom_call.1} parent=11 // pred_region
          %s118 = ssub.s32 256, 256
          %119 = vsyncadd [#allocation9], %s118
          %s120 = sshll.u32 [#allocation8], 4
          %s121 = int_to_ptr.vmem [resolvable:$true] %s120
          %126 = dma.hbm_to_vmem [thread:$0]  %s2, 256, %s121, [#allocation9], 128, 128, 8
        $region20: #{tpu_custom_call.1} parent=11 // pred_fallthru
          _
      $region12: #{tpu_custom_call.1} parent=5 // pred_fallthru
        _
      %p127 = scmp.lt.s32.totalorder %s18, 4
      // Predicated region
      $region21: #{tpu_custom_call.1} parent=5 // pred_check
        %p128 = pneg %p127
      $region22: #{tpu_custom_call.1} parent=5 // pred_check_branch
        %130 = sbr.rel (%p128) target = $region24
      $region23: #{tpu_custom_call.1} parent=5 // pred_region
        _
      $region24: #{tpu_custom_call.1} parent=5 // pred_fallthru
        _
      %p131 = scmp.le.s32.totalorder 1, %s18
      %p132 = scmp.lt.s32.totalorder %s18, 5
      %p133 = pnand %p131, %p132
      %p134 = pneg %p133
      // Predicated region
      $region25: #{tpu_custom_call.1} parent=5 // pred_check
        _
      $region26: #{tpu_custom_call.1} parent=5 // pred_check_branch
        %136 = sbr.rel (%p133) target = $region28
      $region27: #{tpu_custom_call.1} parent=5 // pred_region
        %s137 = ssub.s32 %s18, 1
        // Predicated region
        $region29: #{tpu_custom_call.1} parent=27 // pred_check
          %p138 = pneg %p39
        $region30: #{tpu_custom_call.1} parent=27 // pred_check_branch
          %140 = sbr.rel (%p138) target = $region32
        $region31: #{tpu_custom_call.1} parent=27 // pred_region
          %141 = dma.done [#allocation6], 3200
        $region32: #{tpu_custom_call.1} parent=27 // pred_fallthru
          _
        // Predicated region
        $region33: #{tpu_custom_call.1} parent=27 // pred_check
          %p142 = pneg %p60
        $region34: #{tpu_custom_call.1} parent=27 // pred_check_branch
          %144 = sbr.rel (%p142) target = $region36
        $region35: #{tpu_custom_call.1} parent=27 // pred_region
          %145 = dma.done [#allocation9], 256
        $region36: #{tpu_custom_call.1} parent=27 // pred_fallthru
          _
        %p146 = pneg %p39
        %p147 = pneg %p36
        %p148 = pneg %p60
        %p149 = pneg %p57
        %p150 = pneg %p86
        %p151 = pneg %p83
        %s152 = sand.u32 %s73, 1
        %s153 = scalar_lea.sflag [#allocation7], %s152
        %s154 = sand.u32 %s73, 1
        %s155 = smul.addr %s154, 8
        %s156 = scalar_lea.vmem [#allocation10], %s155
        %p157 = scmp.eq.s32.totalorder %s23, 0
        // Predicated region
        $region37: #{tpu_custom_call.1} parent=27 // pred_check
          %p158 = pneg %p157
        $region38: #{tpu_custom_call.1} parent=27 // pred_check_branch
          %160 = sbr.rel (%p158) target = $region40
        $region39: #{tpu_custom_call.1} parent=27 // pred_region
          %v161 = vld [vmem:[#allocation8 + $0x8] sm:$0x3]
          %vm162 = vcmask 254976
          %163 = vst.msk [vmem:[#allocation2] sm:$0x3] %vm162, %v161
        $region40: #{tpu_custom_call.1} parent=27 // pred_fallthru
          _
        %s164 = sld [smem:[#allocation4 + %s23]]
        %p165 = scmp.lt.s32.totalorder %s164, 15
        %s166 = scalar_select %p165, %s164, 15
        %p167 = scmp.gt.s32.totalorder %s166, 0
        %s168 = scalar_select %p167, %s166, 0
        %v169 = vld [vmem:[#allocation8] sm:$0xff]
        %v170 = vld [vmem:[#allocation2] sm:$0x1]
        %v171 = vld [vmem:[#allocation2 + $0x1] sm:$0x1]
        %s172 = sadd.s32 %s168, 184
        %s173 = scalar_lea.vmem [#allocation5], %s172
        %v174 = vld [vmem:[%s173] sm:$0x1]
        %v175 = vlaneseq
        %v176 = vshrl.u32 %v175, 7
        %v177 = vsub.s32 0, %v176
        %v178 = vrot.slane %v174, %v177
        %180 = vrot.lane.b32.xlu0 %v169, 32
        %v181 = vpop.permute.xlu0 %180
        %vm183 = vcmask 261120
        %v184 = vsel %vm183, %v178, %v181
        %v185 = vld [vmem:[#allocation5 + $0x48] sm:$0xff]
        %v186 = vld [vmem:[#allocation5 + $0x50] sm:$0xff]
        %v187 = vld [vmem:[#allocation5 + $0x58] sm:$0xff]
        %v188 = vld [vmem:[#allocation5 + $0x60] sm:$0xff]
        %v189 = vld [vmem:[#allocation5 + $0x68] sm:$0xff]
        %v190 = vld [vmem:[#allocation5 + $0x70] sm:$0xff]
        %v191 = vld [vmem:[#allocation5 + $0x78] sm:$0xff]
        %v192 = vld [vmem:[#allocation5 + $0x80] sm:$0xff]
        %v193 = vld [vmem:[#allocation5 + $0x88] sm:$0x1]
        %v194 = vlaneseq
        %v195 = vshrl.u32 %v194, 7
        %v196 = vsub.s32 0, %v195
        %v197 = vrot.slane %v193, %v196
        %vm198 = vcmask 523264
        %v200 = vsel %vm198, %v184, 0
        %202 = vmatprep.subr.mxu0 0.0
        %203 = vmatpush1.msra.mxu0 0.0
        %204 = vmatprep.subr.mxu0 0.0
        %205 = vmatpush1.msra.mxu0 0.0
        %206 = vmatprep.subr.mxu0 0.0
        %207 = vmatpush1.msra.mxu0 0.0
        %208 = vmatprep.subr.mxu0 0.0
        %209 = vmatpush1.msra.mxu0 0.0
        %210 = vmatprep.subr.mxu0 0.0
        %211 = vmatpush1.msra.mxu0 0.0
        %212 = vmatprep.subr.mxu0 0.0
        %213 = vmatpush1.msra.mxu0 0.0
        %214 = vmatprep.subr.mxu0 0.0
        %215 = vmatpush1.msra.mxu0 0.0
        %216 = vmatprep.subr.mxu0 0.0
        %217 = vmatpush1.msra.mxu0 0.0
        %218 = vmatprep.subr.mxu0 0.0
        %219 = vmatpush1.msra.mxu0 %v192
        %220 = vmatprep.subr.mxu0 0.0
        %221 = vmatpush1.msra.mxu0 %v191
        %222 = vmatprep.subr.mxu0 0.0
        %223 = vmatpush1.msra.mxu0 %v190
        %224 = vmatprep.subr.mxu0 0.0
        %225 = vmatpush1.msra.mxu0 %v189
        %226 = vmatprep.subr.mxu0 0.0
        %227 = vmatpush1.msra.mxu0 %v188
        %228 = vmatprep.subr.mxu0 0.0
        %229 = vmatpush1.msra.mxu0 %v187
        %230 = vmatprep.subr.mxu0 0.0
        %231 = vmatpush1.msra.mxu0 %v186
        %232 = vmatprep.subr.mxu0 0.0
        %233 = vmatpush1.msra.mxu0 %v185
        %234 = vmatprep.subr.mxu0 0.0
        %235 = vmatpush2.msra.mxu0 0.0
        %236 = vmatprep.subr.mxu0 0.0
        %237 = vmatpush2.msra.mxu0 0.0
        %238 = vmatprep.subr.mxu0 0.0
        %239 = vmatpush2.msra.mxu0 0.0
        %240 = vmatprep.subr.mxu0 0.0
        %241 = vmatpush2.msra.mxu0 0.0
        %242 = vmatprep.subr.mxu0 0.0
        %243 = vmatpush2.msra.mxu0 0.0
        %244 = vmatprep.subr.mxu0 0.0
        %245 = vmatpush2.msra.mxu0 0.0
        %246 = vmatprep.subr.mxu0 0.0
        %247 = vmatpush2.msra.mxu0 0.0
        %248 = vmatprep.subr.mxu0 0.0
        %249 = vmatpush2.msra.mxu0 0.0
        %250 = vmatprep.subr.mxu0 0.0
        %251 = vmatpush2.msra.mxu0 0.0
        %252 = vmatprep.subr.mxu0 0.0
        %253 = vmatpush2.msra.mxu0 0.0
        %254 = vmatprep.subr.mxu0 0.0
        %255 = vmatpush2.msra.mxu0 0.0
        %256 = vmatprep.subr.mxu0 0.0
        %257 = vmatpush2.msra.mxu0 0.0
        %258 = vmatprep.subr.mxu0 0.0
        %259 = vmatpush2.msra.mxu0 0.0
        %260 = vmatprep.subr.mxu0 0.0
        %261 = vmatpush2.msra.mxu0 0.0
        %262 = vmatprep.subr.mxu0 0.0
        %263 = vmatpush2.msra.mxu0 0.0
        %264 = vmatprep.subr.mxu0 0.0
        %265 = vmatpush2.msra.mxu0 0.0
        %266 = vmatprep.mubr.f32.mxu0 0.0
        %267 = vmatmul.mubr.f32.gmra.mxu0 %v200
        %v268 = vpop.f32.mrf.mxu0
        %v269 = vadd.f32 %v197, %v268
        %v270 = vpop.f32.mrf.mxu0
        %271 = vdwg.mxu0
        %v272 = vtanh.pop %v269
        %v273 = vld [vmem:[#allocation5 + $0x89] sm:$0x1]
        %v274 = vld [vmem:[#allocation5 + $0x8a] sm:$0x1]
        %v275 = vlaneseq
        %v276 = vshrl.u32 %v275, 7
        %v277 = vsub.s32 0, %v276
        %v278 = vrot.slane %v273, %v277
        %v279 = vmul.f32 %v272, %v278
        %v280 = vsel %vm183, %v279, 0.0
        %281 = vadd.xlane.f32.xlu0 %v280
        %v282 = vpop.xlane.xlu0 %281
        %v283 = vlaneseq
        %v284 = vshrl.u32 %v283, 7
        %v285 = vsub.s32 0, %v284
        %v286 = vrot.slane %v274, %v285
        %v287 = vadd.f32 %v282, %v286
        %v288 = vlaneseq
        %v289 = vshrl.u32 %v288, 7
        %v290 = vlaneseq
        %v291 = vand.u32 %v290, 127
        %vm292 = vcmp.eq.s32.totalorder %v289, %v291
        %v293 = vsel %vm292, 1, 0
        %v294 = vcvt.s32.f32 %v293
        %296 = vset.pattern.permute.xlu0 0
        %297 = vperm.xlu0 %296, %v287
        %v298 = vpop.permute.xlu0 %297
        %v300 = vmul.f32 %v298, %v294
        %vm301 = vcmask 64512
        %v302 = vsel %vm301, %v300, 0.0
        %v303 = vrot.slane %v302, 4
        %v304 = vadd.f32 %v302, %v303
        %v305 = vrot.slane %v304, 2
        %v306 = vadd.f32 %v304, %v305
        %v307 = vrot.slane %v306, 1
        %v308 = vadd.f32 %v306, %v307
        %v309 = vsel %vm301, %v308, -inf
        %310 = vmax.xlane.f32.xlu0 %v309
        %v311 = vpop.xlane.xlu0 %310
        %v312 = vsub.f32 %v308, %v311
        %v313 = vmul.f32 %v312, 1.442695
        %v314 = vpow.pop %v313
        %v315 = vsel %vm301, %v314, 0.0
        %316 = vadd.xlane.f32.xlu0 %v315
        %v317 = vpop.xlane.xlu0 %316
        %v318 = vrcp.pop %v317
        %v319 = vmul.f32 %v314, %v318
        %v321 = vsel %vm301, %v319, 0
        %323 = vmatprep.subr.mxu0 0.0
        %324 = vmatpush1.msra.mxu0 0.0
        %325 = vmatprep.subr.mxu0 0.0
        %326 = vmatpush1.msra.mxu0 0.0
        %327 = vmatprep.subr.mxu0 0.0
        %328 = vmatpush1.msra.mxu0 0.0
        %329 = vmatprep.subr.mxu0 0.0
        %330 = vmatpush1.msra.mxu0 0.0
        %331 = vmatprep.subr.mxu0 0.0
        %332 = vmatpush1.msra.mxu0 0.0
        %333 = vmatprep.subr.mxu0 0.0
        %334 = vmatpush1.msra.mxu0 0.0
        %335 = vmatprep.subr.mxu0 0.0
        %336 = vmatpush1.msra.mxu0 0.0
        %337 = vmatprep.subr.mxu0 0.0
        %338 = vmatpush1.msra.mxu0 0.0
        %339 = vmatprep.subr.mxu0 0.0
        %340 = vmatpush1.msra.mxu0 0.0
        %341 = vmatprep.subr.mxu0 0.0
        %342 = vmatpush1.msra.mxu0 0.0
        %343 = vmatprep.subr.mxu0 0.0
        %344 = vmatpush1.msra.mxu0 0.0
        %345 = vmatprep.subr.mxu0 0.0
        %346 = vmatpush1.msra.mxu0 0.0
        %347 = vmatprep.subr.mxu0 0.0
        %348 = vmatpush1.msra.mxu0 0.0
        %349 = vmatprep.subr.mxu0 0.0
        %350 = vmatpush1.msra.mxu0 0.0
        %351 = vmatprep.subr.mxu0 0.0
        %352 = vmatpush1.msra.mxu0 0.0
        %353 = vmatprep.subr.mxu0 0.0
        %354 = vmatpush1.msra.mxu0 %v169
        %355 = vmatprep.subr.mxu0 0.0
        %356 = vmatpush2.msra.mxu0 0.0
        %357 = vmatprep.subr.mxu0 0.0
        %358 = vmatpush2.msra.mxu0 0.0
        %359 = vmatprep.subr.mxu0 0.0
        %360 = vmatpush2.msra.mxu0 0.0
        %361 = vmatprep.subr.mxu0 0.0
        %362 = vmatpush2.msra.mxu0 0.0
        %363 = vmatprep.subr.mxu0 0.0
        %364 = vmatpush2.msra.mxu0 0.0
        %365 = vmatprep.subr.mxu0 0.0
        %366 = vmatpush2.msra.mxu0 0.0
        %367 = vmatprep.subr.mxu0 0.0
        %368 = vmatpush2.msra.mxu0 0.0
        %369 = vmatprep.subr.mxu0 0.0
        %370 = vmatpush2.msra.mxu0 0.0
        %371 = vmatprep.subr.mxu0 0.0
        %372 = vmatpush2.msra.mxu0 0.0
        %373 = vmatprep.subr.mxu0 0.0
        %374 = vmatpush2.msra.mxu0 0.0
        %375 = vmatprep.subr.mxu0 0.0
        %376 = vmatpush2.msra.mxu0 0.0
        %377 = vmatprep.subr.mxu0 0.0
        %378 = vmatpush2.msra.mxu0 0.0
        %379 = vmatprep.subr.mxu0 0.0
        %380 = vmatpush2.msra.mxu0 0.0
        %381 = vmatprep.subr.mxu0 0.0
        %382 = vmatpush2.msra.mxu0 0.0
        %383 = vmatprep.subr.mxu0 0.0
        %384 = vmatpush2.msra.mxu0 0.0
        %385 = vmatprep.subr.mxu0 0.0
        %386 = vmatpush2.msra.mxu0 0.0
        %387 = vmatprep.mubr.f32.mxu0 0.0
        %388 = vmatmul.mubr.f32.gmra.mxu0 %v321
        %v389 = vpop.f32.mrf.mxu0
        %v390 = vadd.f32 0.0, %v389
        %v391 = vpop.f32.mrf.mxu0
        %392 = vdwg.mxu0
        %394 = vrot.lane.b32.xlu0 %v170, 32
        %v395 = vpop.permute.xlu0 %394
        %v397 = vsel %vm183, %v390, %v395
        %v398 = vld [vmem:[#allocation5] sm:$0xff]
        %v399 = vld [vmem:[#allocation5 + $0x8] sm:$0xff]
        %v400 = vld [vmem:[#allocation5 + $0x10] sm:$0xff]
        %v401 = vld [vmem:[#allocation5 + $0x18] sm:$0xff]
        %v402 = vld [vmem:[#allocation5 + $0x20] sm:$0xff]
        %v403 = vld [vmem:[#allocation5 + $0x28] sm:$0xff]
        %v404 = vld [vmem:[#allocation5 + $0x30] sm:$0xff]
        %v405 = vld [vmem:[#allocation5 + $0x38] sm:$0xff]
        %v406 = vld [vmem:[#allocation5 + $0x40] sm:$0x1]
        %v408 = vsel %vm198, %v397, 0
        %410 = vmatprep.subr.mxu0 0.0
        %411 = vmatpush1.msra.mxu0 0.0
        %412 = vmatprep.subr.mxu0 0.0
        %413 = vmatpush1.msra.mxu0 0.0
        %414 = vmatprep.subr.mxu0 0.0
        %415 = vmatpush1.msra.mxu0 0.0
        %416 = vmatprep.subr.mxu0 0.0
        %417 = vmatpush1.msra.mxu0 0.0
        %418 = vmatprep.subr.mxu0 0.0
        %419 = vmatpush1.msra.mxu0 0.0
        %420 = vmatprep.subr.mxu0 0.0
        %421 = vmatpush1.msra.mxu0 0.0
        %422 = vmatprep.subr.mxu0 0.0
        %423 = vmatpush1.msra.mxu0 0.0
        %424 = vmatprep.subr.mxu0 0.0
        %425 = vmatpush1.msra.mxu0 0.0
        %426 = vmatprep.subr.mxu0 0.0
        %427 = vmatpush1.msra.mxu0 %v405
        %428 = vmatprep.subr.mxu0 0.0
        %429 = vmatpush1.msra.mxu0 %v404
        %430 = vmatprep.subr.mxu0 0.0
        %431 = vmatpush1.msra.mxu0 %v403
        %432 = vmatprep.subr.mxu0 0.0
        %433 = vmatpush1.msra.mxu0 %v402
        %434 = vmatprep.subr.mxu0 0.0
        %435 = vmatpush1.msra.mxu0 %v401
        %436 = vmatprep.subr.mxu0 0.0
        %437 = vmatpush1.msra.mxu0 %v400
        %438 = vmatprep.subr.mxu0 0.0
        %439 = vmatpush1.msra.mxu0 %v399
        %440 = vmatprep.subr.mxu0 0.0
        %441 = vmatpush1.msra.mxu0 %v398
        %442 = vmatprep.subr.mxu0 0.0
        %443 = vmatpush2.msra.mxu0 0.0
        %444 = vmatprep.subr.mxu0 0.0
        %445 = vmatpush2.msra.mxu0 0.0
        %446 = vmatprep.subr.mxu0 0.0
        %447 = vmatpush2.msra.mxu0 0.0
        %448 = vmatprep.subr.mxu0 0.0
        %449 = vmatpush2.msra.mxu0 0.0
        %450 = vmatprep.subr.mxu0 0.0
        %451 = vmatpush2.msra.mxu0 0.0
        %452 = vmatprep.subr.mxu0 0.0
        %453 = vmatpush2.msra.mxu0 0.0
        %454 = vmatprep.subr.mxu0 0.0
        %455 = vmatpush2.msra.mxu0 0.0
        %456 = vmatprep.subr.mxu0 0.0
        %457 = vmatpush2.msra.mxu0 0.0
        %458 = vmatprep.subr.mxu0 0.0
        %459 = vmatpush2.msra.mxu0 0.0
        %460 = vmatprep.subr.mxu0 0.0
        %461 = vmatpush2.msra.mxu0 0.0
        %462 = vmatprep.subr.mxu0 0.0
        %463 = vmatpush2.msra.mxu0 0.0
        %464 = vmatprep.subr.mxu0 0.0
        %465 = vmatpush2.msra.mxu0 0.0
        %466 = vmatprep.subr.mxu0 0.0
        %467 = vmatpush2.msra.mxu0 0.0
        %468 = vmatprep.subr.mxu0 0.0
        %469 = vmatpush2.msra.mxu0 0.0
        %470 = vmatprep.subr.mxu0 0.0
        %471 = vmatpush2.msra.mxu0 0.0
        %472 = vmatprep.subr.mxu0 0.0
        %473 = vmatpush2.msra.mxu0 0.0
        %474 = vmatprep.mubr.f32.mxu0 0.0
        %475 = vmatmul.mubr.f32.gmra.mxu0 %v408
        %v476 = vpop.f32.mrf.mxu0
        %v477 = vadd.f32 %v406, %v476
        %v478 = vpop.f32.mrf.mxu0
        %479 = vdwg.mxu0
        %v480 = vxor.u32 %v477, 2147483648
        %v481 = vmul.f32 %v480, 1.442695
        %v482 = vpow.pop %v481
        %v483 = vadd.f32 %v482, 1.0
        %v484 = vrcp.pop %v483
        %v485 = vmul.f32 1.0, %v484
        %v486 = vtanh.pop %v477
        %488 = vrot.lane.b32.xlu0 %v171, 32
        %v489 = vpop.permute.xlu0 %488
        %v491 = vmul.f32 %v485, %v489
        %493 = vrot.lane.b32.xlu0 %v486, 64
        %v494 = vpop.permute.xlu0 %493
        %v496 = vmul.f32 %v485, %v494
        %498 = vrot.lane.b32.xlu0 %v496, 32
        %v499 = vpop.permute.xlu0 %498
        %v501 = vadd.f32 %v491, %v499
        %v502 = vtanh.pop %v501
        %504 = vrot.lane.b32.xlu0 %v502, 64
        %v505 = vpop.permute.xlu0 %504
        %v507 = vmul.f32 %v485, %v505
        %509 = vrot.lane.b32.xlu0 %v507, 32
        %v510 = vpop.permute.xlu0 %509
        %vm512 = vcmask 253952
        %513 = vst.msk [vmem:[#allocation2] sm:$0x1] %vm512, %v510
        %515 = vrot.lane.b32.xlu0 %v501, 96
        %v516 = vpop.permute.xlu0 %515
        %518 = vst.msk [vmem:[#allocation2 + $0x1] sm:$0x1] %vm512, %v516
        %v519 = vld [vmem:[#allocation5 + $0x90] sm:$0xff]
        %v520 = vld [vmem:[#allocation5 + $0x98] sm:$0xff]
        %v521 = vld [vmem:[#allocation5 + $0xa0] sm:$0xff]
        %v522 = vld [vmem:[#allocation5 + $0xa8] sm:$0xff]
        %v523 = vld [vmem:[#allocation5 + $0xb0] sm:$0x1]
        %v524 = vsel %vm183, %v510, 0
        %526 = vmatprep.subr.mxu0 0.0
        %527 = vmatpush1.msra.mxu0 0.0
        %528 = vmatprep.subr.mxu0 0.0
        %529 = vmatpush1.msra.mxu0 0.0
        %530 = vmatprep.subr.mxu0 0.0
        %531 = vmatpush1.msra.mxu0 0.0
        %532 = vmatprep.subr.mxu0 0.0
        %533 = vmatpush1.msra.mxu0 0.0
        %534 = vmatprep.subr.mxu0 0.0
        %535 = vmatpush1.msra.mxu0 0.0
        %536 = vmatprep.subr.mxu0 0.0
        %537 = vmatpush1.msra.mxu0 0.0
        %538 = vmatprep.subr.mxu0 0.0
        %539 = vmatpush1.msra.mxu0 0.0
        %540 = vmatprep.subr.mxu0 0.0
        %541 = vmatpush1.msra.mxu0 0.0
        %542 = vmatprep.subr.mxu0 0.0
        %543 = vmatpush1.msra.mxu0 0.0
        %544 = vmatprep.subr.mxu0 0.0
        %545 = vmatpush1.msra.mxu0 0.0
        %546 = vmatprep.subr.mxu0 0.0
        %547 = vmatpush1.msra.mxu0 0.0
        %548 = vmatprep.subr.mxu0 0.0
        %549 = vmatpush1.msra.mxu0 0.0
        %550 = vmatprep.subr.mxu0 0.0
        %551 = vmatpush1.msra.mxu0 %v522
        %552 = vmatprep.subr.mxu0 0.0
        %553 = vmatpush1.msra.mxu0 %v521
        %554 = vmatprep.subr.mxu0 0.0
        %555 = vmatpush1.msra.mxu0 %v520
        %556 = vmatprep.subr.mxu0 0.0
        %557 = vmatpush1.msra.mxu0 %v519
        %558 = vmatprep.subr.mxu0 0.0
        %559 = vmatpush2.msra.mxu0 0.0
        %560 = vmatprep.subr.mxu0 0.0
        %561 = vmatpush2.msra.mxu0 0.0
        %562 = vmatprep.subr.mxu0 0.0
        %563 = vmatpush2.msra.mxu0 0.0
        %564 = vmatprep.subr.mxu0 0.0
        %565 = vmatpush2.msra.mxu0 0.0
        %566 = vmatprep.subr.mxu0 0.0
        %567 = vmatpush2.msra.mxu0 0.0
        %568 = vmatprep.subr.mxu0 0.0
        %569 = vmatpush2.msra.mxu0 0.0
        %570 = vmatprep.subr.mxu0 0.0
        %571 = vmatpush2.msra.mxu0 0.0
        %572 = vmatprep.subr.mxu0 0.0
        %573 = vmatpush2.msra.mxu0 0.0
        %574 = vmatprep.subr.mxu0 0.0
        %575 = vmatpush2.msra.mxu0 0.0
        %576 = vmatprep.subr.mxu0 0.0
        %577 = vmatpush2.msra.mxu0 0.0
        %578 = vmatprep.subr.mxu0 0.0
        %579 = vmatpush2.msra.mxu0 0.0
        %580 = vmatprep.subr.mxu0 0.0
        %581 = vmatpush2.msra.mxu0 0.0
        %582 = vmatprep.subr.mxu0 0.0
        %583 = vmatpush2.msra.mxu0 0.0
        %584 = vmatprep.subr.mxu0 0.0
        %585 = vmatpush2.msra.mxu0 0.0
        %586 = vmatprep.subr.mxu0 0.0
        %587 = vmatpush2.msra.mxu0 0.0
        %588 = vmatprep.subr.mxu0 0.0
        %589 = vmatpush2.msra.mxu0 0.0
        %590 = vmatprep.mubr.f32.mxu0 0.0
        %591 = vmatmul.mubr.f32.gmra.mxu0 %v524
        %v592 = vpop.f32.mrf.mxu0
        %v593 = vadd.f32 %v523, %v592
        %v594 = vpop.f32.mrf.mxu0
        %595 = vdwg.mxu0
        %vm596 = vcmask 122880
        %v597 = vsel %vm596, %v593, -inf
        %598 = vmax.xlane.f32.xlu0 %v597
        %v599 = vpop.xlane.xlu0 %598
        %v600 = vsub.f32 %v593, %v599
        %v601 = vmul.f32 %v600, 1.442695
        %v602 = vpow.pop %v601
        %v603 = vsel %vm596, %v602, 0.0
        %604 = vadd.xlane.f32.xlu0 %v603
        %v605 = vpop.xlane.xlu0 %604
        %v606 = vlog2.pop %v605
        %v607 = vmul.f32 %v606, 0.6931472
        %v608 = vsub.f32 %v600, %v607
        %vm609 = vcmask 130048
        %v610 = vsel %vm609, %v608, 0.0
        %v611 = vsel %vm301, %v319, 0.0
        %v612 = vsel %vm183, %v510, 0.0
        %v613 = vsel %vm183, %v516, 0.0
        %v615 = vrot.slane %v611, 7
        %v618 = vrot.slane %v612, 6
        %v621 = vrot.slane %v613, 5
        %vm623 = vcmask 1040384
        %v624 = vsel %vm623, %v610, %v615
        %vm625 = vcmask 1041408
        %v626 = vsel %vm625, %v624, %v618
        %vm627 = vcmask 1042432
        %v628 = vsel %vm627, %v626, %v621
        %vm629 = vcmask 1043456
        %v630 = vsel %vm629, %v628, 0.0
        %631 = vst [vmem:[%s156] sm:$0xff] %v630
        %s632 = sand.u32 %s73, 1
        %s633 = scalar_lea.sflag [#allocation7], %s632
        %s634 = sand.u32 %s73, 1
        %s635 = smul.addr %s634, 8
        %s636 = scalar_lea.vmem [#allocation10], %s635
        // Predicated region
        $region41: #{tpu_custom_call.1} parent=27 // pred_check
          %p637 = pneg %p83
        $region42: #{tpu_custom_call.1} parent=27 // pred_check_branch
          %639 = sbr.rel (%p637) target = $region44
        $region43: #{tpu_custom_call.1} parent=27 // pred_region
          %s641 = ssub.s32 128, 128
          %642 = vsyncadd %s633, %s641
          %s643 = smul.addr %s23, 128
          %s644 = scalar_lea.hbm %s3, %s643
          %s646 = sshll.u32 %s636, 4
          %s647 = int_to_ptr.vmem [resolvable:$true] %s646
          %649 = dma.vmem_to_hbm [thread:$0]  %s647, 128, %s644, %s633
        $region44: #{tpu_custom_call.1} parent=27 // pred_fallthru
          _
      $region28: #{tpu_custom_call.1} parent=5 // pred_fallthru
        _
      %p650 = scmp.le.s32.totalorder 2, %s18
      // Predicated region
      $region45: #{tpu_custom_call.1} parent=5 // pred_check
        %p651 = pneg %p650
      $region46: #{tpu_custom_call.1} parent=5 // pred_check_branch
        %653 = sbr.rel (%p651) target = $region48
      $region47: #{tpu_custom_call.1} parent=5 // pred_region
        %s654 = ssub.s32 %s18, 2
        // Predicated region
        $region49: #{tpu_custom_call.1} parent=47 // pred_check
          %p655 = pneg %p89
        $region50: #{tpu_custom_call.1} parent=47 // pred_check_branch
          %657 = sbr.rel (%p655) target = $region52
        $region51: #{tpu_custom_call.1} parent=47 // pred_region
          %s658 = sand.u32 %s74, 1
          %s659 = scalar_lea.sflag [#allocation7], %s658
          %s660 = sand.u32 %s74, 1
          %s661 = smul.addr %s660, 8
          %s662 = scalar_lea.vmem [#allocation10], %s661
          %663 = dma.done %s659, 128
        $region52: #{tpu_custom_call.1} parent=47 // pred_fallthru
          _
      $region48: #{tpu_custom_call.1} parent=5 // pred_fallthru
        _
    $region6: #{tpu_custom_call.1} parent=1 // loop_footer
      %s22 = sadd.s32 1, %s18
    $region7: #{tpu_custom_call.1} parent=1 // loop_footer_branch
      %17 = sbr.rel target = $region3
    $region8: #{tpu_custom_call.1} parent=1 // loop_exit
      _
    %664 = vsyncpa [#allocation6], 1
    %s665 = scalar_lea.sflag [#allocation6], 1
    %666 = vsyncpa %s665, 1
    %667 = vsyncpa [#allocation9], 1
    %668 = vsyncpa [#allocation7], 1
    %s669 = scalar_lea.sflag [#allocation7], 1
    %670 = vsyncpa %s669, 1

</llo_original>
